<compile_context>
chip_gen: v6e
topology: v6e:2x2x1
jax: 0.10.0
libtpu: 0.0.40
codegen_flags: <defaults>
</compile_context>

<pallas_src>
import jax
import jax.numpy as jnp
from jax.experimental import pallas as pl
from jax.experimental.pallas import tpu as pltpu

TN_MAX = 16384  # max spatial (lane) tile; multiple of 128


# ---------------- Pallas kernels ----------------

def _conv_stats_kernel(p_ref, w_ref, y_ref, sum_ref, sq_ref):
    """Fused im2col matmul + BN batch-stat partials (no bias: it cancels in BN).

    p_ref   : (K,  TN)  bf16 im2col patches, one image / one spatial tile
    w_ref   : (OC, K)   bf16 flattened conv weights (OIHW -> [OC, C*KH*KW])
    y_ref   : (OC, TN)  bf16 conv output tile (bias-free, pre-BN)
    sum_ref : (OC, 1)   f32 per-(image, tile) partial sum
    sq_ref  : (OC, 1)   f32 per-(image, tile) partial sum of squares
    """
    y = jnp.dot(w_ref[...], p_ref[...], preferred_element_type=jnp.float32)
    y_ref[...] = y.astype(y_ref.dtype)
    # Padded spatial lanes of P are zero -> corresponding y lanes are exactly zero and
    # contribute nothing to the statistics (no masking needed).
    sum_ref[...] = jnp.sum(y, axis=1, keepdims=True)
    sq_ref[...] = jnp.sum(y * y, axis=1, keepdims=True)


def _bn_relu_kernel(y_ref, scale_ref, shift_ref, o_ref):
    """Fused per-channel affine (BN or plain bias) + ReLU on (NB, OC, TN) blocks."""
    y = y_ref[...].astype(jnp.float32)
    # (OC, 1) broadcasts against (NB, OC, TN).
    o_ref[...] = jnp.maximum(y * scale_ref[...] + shift_ref[...], 0.0)


# ---------------- glue ----------------

def _im2col_taps(x, kh, kw, stride, padding):
    """Pt [N, K, OH*OW] with K ordered (c, kh, kw) to match OIHW weight flatten."""
    n, c, h, w = x.shape
    xp = jnp.pad(x, ((0, 0), (0, 0), (padding, padding), (padding, padding)))
    oh = (h + 2 * padding - kh) // stride + 1
    ow = (w + 2 * padding - kw) // stride + 1
    taps = []
    for i in range(kh):
        for j in range(kw):
            taps.append(xp[:, :, i:i + stride * oh:stride, j:j + stride * ow:stride])
    p = jnp.stack(taps, axis=2)                   # [N, C, KH*KW, OH, OW]
    p = p.reshape(n, c * kh * kw, oh * ow)        # [N, K, SP]  (contiguous -> free reshape)
    return p, oh, ow


def _vmem_budget():
    """Generation-aware (working-set budget, vmem_limit_bytes)."""
    cap = 64 * 1024 * 1024  # conservative fallback (fits every generation)
    try:
        info = pltpu.get_tpu_info()
        cap = int(getattr(info, "vmem_capacity_bytes", cap) or cap)
    except Exception:
        pass
    vmem_limit = int(min((cap * 3) // 4, 96 * 1024 * 1024))
    budget = max(4 * 1024 * 1024, vmem_limit - 4 * 1024 * 1024)  # headroom for W/stats/scratch
    return budget, vmem_limit


def _largest_divisor_leq(n, cap):
    cap = max(1, min(n, int(cap)))
    for d in range(cap, 0, -1):
        if n % d == 0:
            return d
    return 1


def conv_bn_relu(x, conv_w, conv_b, bn_gamma, bn_beta, *, stride=1, padding=1,
                 bn=True, eps=1e-5):
    n, c, h, w = x.shape
    oc, _, kh, kw = conv_w.shape
    k = c * kh * kw

    # im2col in bf16 (halves the XLA copy pass and the dominant P stream of the kernel).
    p, oh, ow = _im2col_taps(x.astype(jnp.bfloat16), kh, kw, stride, padding)
    sp = oh * ow
    m = n * sp

    budget, vmem_limit = _vmem_budget()

    # Spatial (lane) tile: as large as the VMEM budget allows (double-buffered bf16
    # (K,TN) + (OC,TN) blocks), then shrunk to minimize padding for that step count.
    bytes_per_lane = (k + oc) * 2 * 2        # bf16 P + bf16 Y blocks, double-buffered
    tn_cap = max(128, (budget // bytes_per_lane) // 128 * 128)
    tn0 = min(TN_MAX, tn_cap)
    n_j = -(-sp // tn0)                      # number of spatial tiles
    tn = -(-(-(-sp // n_j)) // 128) * 128    # round per-tile size up to a lane multiple
    sp_pad = n_j * tn
    if sp_pad != sp:
        p = jnp.pad(p, ((0, 0), (0, 0), (0, sp_pad - sp)))

    w2 = conv_w.reshape(oc, k).astype(jnp.bfloat16)   # [OC, K]

    grid = (n, n_j)

    # --- fused conv (im2col matmul, bias-free) + BN batch-stat partials ---
    y, s, sq = pl.pallas_call(
        _conv_stats_kernel,
        out_shape=(jax.ShapeDtypeStruct((n, oc, sp_pad), jnp.bfloat16),
                   jax.ShapeDtypeStruct((n, n_j, oc, 1), jnp.float32),
                   jax.ShapeDtypeStruct((n, n_j, oc, 1), jnp.float32)),
        grid_spec=pltpu.PrefetchScalarGridSpec(
            num_scalar_prefetch=0,
            grid=grid,
            in_specs=[
                pl.BlockSpec((None, k, tn), lambda i, j: (i, 0, j)),
                pl.BlockSpec((oc, k), lambda i, j: (0, 0)),
            ],
            out_specs=[
                pl.BlockSpec((None, oc, tn), lambda i, j: (i, 0, j)),
                pl.BlockSpec((None, None, oc, 1), lambda i, j: (i, j, 0, 0)),
                pl.BlockSpec((None, None, oc, 1), lambda i, j: (i, j, 0, 0)),
            ],
        ),
        compiler_params=pltpu.CompilerParams(
            dimension_semantics=("parallel", "parallel"),
            vmem_limit_bytes=vmem_limit),
    )(p, w2)

    if bn:
        # Combine tiny per-(image, tile) partial sums in plain JAX.  Since y is
        # bias-free, the bias cancels exactly in (y_with_bias - mean_with_bias).
        mean = jnp.sum(s, axis=(0, 1)) / m                                 # (OC, 1)
        var = jnp.maximum(jnp.sum(sq, axis=(0, 1)) / m - mean * mean, 0.0)  # biased var
        scale = bn_gamma.reshape(oc, 1).astype(jnp.float32) * jax.lax.rsqrt(var + eps)
        shift = bn_beta.reshape(oc, 1).astype(jnp.float32) - mean * scale
    else:
        scale = jnp.ones((oc, 1), jnp.float32)
        shift = conv_b.reshape(oc, 1).astype(jnp.float32)   # bias folded into the affine

    # --- fused per-channel affine + ReLU; fold the batch into the block so each grid
    # step moves a large, lane-dense slab (no per-step-overhead domination) ---
    per_batch_bytes = oc * tn * (2 + 4) * 2   # bf16 in + f32 out, double-buffered
    nb = _largest_divisor_leq(n, max(1, budget // per_batch_bytes))

    out = pl.pallas_call(
        _bn_relu_kernel,
        out_shape=jax.ShapeDtypeStruct((n, oc, sp_pad), jnp.float32),
        grid_spec=pltpu.PrefetchScalarGridSpec(
            num_scalar_prefetch=0,
            grid=(n // nb, n_j),
            in_specs=[
                pl.BlockSpec((nb, oc, tn), lambda i, j: (i, 0, j)),
                pl.BlockSpec((oc, 1), lambda i, j: (0, 0)),
                pl.BlockSpec((oc, 1), lambda i, j: (0, 0)),
            ],
            out_specs=pl.BlockSpec((nb, oc, tn), lambda i, j: (i, 0, j)),
        ),
        compiler_params=pltpu.CompilerParams(
            dimension_semantics=("parallel", "parallel"),
            vmem_limit_bytes=vmem_limit),
    )(y, scale, shift)

    if sp_pad != sp:
        out = out[:, :, :sp]
    return out.reshape(n, oc, oh, ow)   # already channel-major: free reshape, no transpose


# ---------------- reference (plain JAX) ----------------

def _reference(x, conv_w, conv_b, gamma, beta, stride, padding, bn=True, eps=1e-5):
    y = jax.lax.conv_general_dilated(
        x, conv_w, window_strides=(stride, stride),
        padding=[(padding, padding), (padding, padding)],
        dimension_numbers=("NCHW", "OIHW", "NCHW"))
    y = y + conv_b.reshape(1, -1, 1, 1)
    if bn:
        mean = y.mean(axis=(0, 2, 3), keepdims=True)
        var = y.var(axis=(0, 2, 3), keepdims=True)
        y = (y - mean) / jnp.sqrt(var + eps)
        y = y * gamma.reshape(1, -1, 1, 1) + beta.reshape(1, -1, 1, 1)
    return jnp.maximum(y, 0.0)


if __name__ == "__main__":
    # ConvBnRelu(kernel_size=3, in_channels=4, out_channels=8, stride=1, padding=1, bn=True)
    N, C, H, W = 2, 4, 16, 16
    OC, KH, KW = 8, 3, 3
    stride, padding = 1, 1

    key = jax.random.PRNGKey(0)
    kx, kw_, kb, kg, kbe = jax.random.split(key, 5)
    x = jax.random.normal(kx, (N, C, H, W), jnp.float32)
    conv_w = 0.1 * jax.random.normal(kw_, (OC, C, KH, KW), jnp.float32)
    conv_b = 0.1 * jax.random.normal(kb, (OC,), jnp.float32)
    bn_gamma = 1.0 + 0.1 * jax.random.normal(kg, (OC,), jnp.float32)
    bn_beta = 0.1 * jax.random.normal(kbe, (OC,), jnp.float32)

    out = conv_bn_relu(x, conv_w, conv_b, bn_gamma, bn_beta,
                       stride=stride, padding=padding, bn=True)
    out = jax.block_until_ready(out)

    ref = _reference(x, conv_w, conv_b, bn_gamma, bn_beta, stride, padding, bn=True)
    assert out.shape == (N, OC, H, W), out.shape
    # Inputs / weights / intermediate Y are intentionally bf16 (stats and accumulation
    # stay f32), so tolerance is set to bf16-level relative error vs the f32 reference.
    max_err = float(jnp.max(jnp.abs(out - ref)))
    assert jnp.allclose(out, ref, atol=3e-2, rtol=3e-2), \
        f"mismatch vs reference, max_err={max_err}"

    print("KERNEL_OK")
</pallas_src>

<mosaic_0001>
module attributes {stable_mosaic.version = 11 : i64} {
  func.func @_conv_stats_kernel(%arg0: i32, %arg1: i32, %arg2: memref<1x36x256xbf16, #tpu.memory_space<vmem>>, %arg3: memref<8x36xbf16, #tpu.memory_space<vmem>>, %arg4: memref<1x8x256xbf16, #tpu.memory_space<vmem>>, %arg5: memref<1x1x8x1xf32, #tpu.memory_space<vmem>>, %arg6: memref<1x1x8x1xf32, #tpu.memory_space<vmem>>) attributes {dimension_semantics = [#tpu.dimension_semantics<parallel>, #tpu.dimension_semantics<parallel>], iteration_bounds = array<i64: 2, 1>, scalar_prefetch = 0 : i64, scratch_operands = 0 : i64, tpu.core_type = #tpu.core_type<tc>, window_params = [{transform_indices = @transform_0, window_bounds = array<i64: 1, 36, 256>}, {pipeline_mode = #tpu.pipeline_mode<synchronous>, transform_indices = @transform_1, window_bounds = array<i64: 8, 36>}, {transform_indices = @transform_2, window_bounds = array<i64: 1, 8, 256>}, {transform_indices = @transform_3, window_bounds = array<i64: 1, 1, 8, 1>}, {transform_indices = @transform_4, window_bounds = array<i64: 1, 1, 8, 1>}]} {
    %c0 = arith.constant 0 : index
    %c0_0 = arith.constant 0 : index
    %0 = vector.load %arg3[%c0, %c0_0] : memref<8x36xbf16, #tpu.memory_space<vmem>>, vector<8x36xbf16>
    %c0_1 = arith.constant 0 : index
    %c0_2 = arith.constant 0 : index
    %c0_3 = arith.constant 0 : index
    %1 = vector.load %arg2[%c0_1, %c0_2, %c0_3] : memref<1x36x256xbf16, #tpu.memory_space<vmem>>, vector<1x36x256xbf16>
    %2 = vector.shape_cast %1 : vector<1x36x256xbf16> to vector<36x256xbf16>
    %cst = arith.constant dense<0.000000e+00> : vector<8x256xf32>
    %3 = tpu.matmul %0, %2, %cst {dimension_numbers = #tpu.dot_dimension_numbers<[1], [0], [0], [1], [0, 0, 1, 1], [], []>} : vector<8x36xbf16>, vector<36x256xbf16>, vector<8x256xf32> -> vector<8x256xf32>
    %4 = arith.truncf %3 : vector<8x256xf32> to vector<8x256xbf16>
    %c0_4 = arith.constant 0 : index
    %c0_5 = arith.constant 0 : index
    %c0_6 = arith.constant 0 : index
    %5 = vector.load %arg4[%c0_4, %c0_5, %c0_6] : memref<1x8x256xbf16, #tpu.memory_space<vmem>>, vector<1x8x256xbf16>
    %6 = vector.shape_cast %5 : vector<1x8x256xbf16> to vector<8x256xbf16>
    %7 = vector.shape_cast %4 : vector<8x256xbf16> to vector<1x8x256xbf16>
    tpu.vector_store %arg4[%c0_4, %c0_5, %c0_6], %7 {strides = array<i32>} : memref<1x8x256xbf16, #tpu.memory_space<vmem>>, vector<1x8x256xbf16>,
    %cst_7 = arith.constant dense<0.000000e+00> : vector<8xf32>
    %8 = vector.multi_reduction <add>, %3, %cst_7 [1] : vector<8x256xf32> to vector<8xf32>
    %9 = vector.shape_cast %8 : vector<8xf32> to vector<8x1xf32>
    %c0_8 = arith.constant 0 : index
    %c0_9 = arith.constant 0 : index
    %c0_10 = arith.constant 0 : index
    %c0_11 = arith.constant 0 : index
    %10 = vector.load %arg5[%c0_8, %c0_9, %c0_10, %c0_11] : memref<1x1x8x1xf32, #tpu.memory_space<vmem>>, vector<1x1x8x1xf32>
    %11 = vector.shape_cast %10 : vector<1x1x8x1xf32> to vector<8x1xf32>
    %12 = vector.shape_cast %9 : vector<8x1xf32> to vector<1x1x8x1xf32>
    tpu.vector_store %arg5[%c0_8, %c0_9, %c0_10, %c0_11], %12 {strides = array<i32>} : memref<1x1x8x1xf32, #tpu.memory_space<vmem>>, vector<1x1x8x1xf32>,
    %13 = arith.mulf %3, %3 : vector<8x256xf32>
    %cst_12 = arith.constant dense<0.000000e+00> : vector<8xf32>
    %14 = vector.multi_reduction <add>, %13, %cst_12 [1] : vector<8x256xf32> to vector<8xf32>
    %15 = vector.shape_cast %14 : vector<8xf32> to vector<8x1xf32>
    %c0_13 = arith.constant 0 : index
    %c0_14 = arith.constant 0 : index
    %c0_15 = arith.constant 0 : index
    %c0_16 = arith.constant 0 : index
    %16 = vector.load %arg6[%c0_13, %c0_14, %c0_15, %c0_16] : memref<1x1x8x1xf32, #tpu.memory_space<vmem>>, vector<1x1x8x1xf32>
    %17 = vector.shape_cast %16 : vector<1x1x8x1xf32> to vector<8x1xf32>
    %18 = vector.shape_cast %15 : vector<8x1xf32> to vector<1x1x8x1xf32>
    tpu.vector_store %arg6[%c0_13, %c0_14, %c0_15, %c0_16], %18 {strides = array<i32>} : memref<1x1x8x1xf32, #tpu.memory_space<vmem>>, vector<1x1x8x1xf32>,
    return
  }
  func.func @transform_0(%arg0: i32, %arg1: i32) -> (i32, i32, i32) {
    %c0_i32 = arith.constant 0 : i32
    %c0_i32_0 = arith.constant 0 : i32
    return %arg0, %c0_i32, %arg1 : i32, i32, i32
  }
  func.func @transform_1(%arg0: i32, %arg1: i32) -> (i32, i32) {
    %c0_i32 = arith.constant 0 : i32
    %c0_i32_0 = arith.constant 0 : i32
    %c0_i32_1 = arith.constant 0 : i32
    return %c0_i32, %c0_i32_0 : i32, i32
  }
  func.func @transform_2(%arg0: i32, %arg1: i32) -> (i32, i32, i32) {
    %c0_i32 = arith.constant 0 : i32
    %c0_i32_0 = arith.constant 0 : i32
    return %arg0, %c0_i32, %arg1 : i32, i32, i32
  }
  func.func @transform_3(%arg0: i32, %arg1: i32) -> (i32, i32, i32, i32) {
    %c0_i32 = arith.constant 0 : i32
    %c0_i32_0 = arith.constant 0 : i32
    %c0_i32_1 = arith.constant 0 : i32
    return %arg0, %arg1, %c0_i32, %c0_i32_0 : i32, i32, i32, i32
  }
  func.func @transform_4(%arg0: i32, %arg1: i32) -> (i32, i32, i32, i32) {
    %c0_i32 = arith.constant 0 : i32
    %c0_i32_0 = arith.constant 0 : i32
    %c0_i32_1 = arith.constant 0 : i32
    return %arg0, %arg1, %c0_i32, %c0_i32_0 : i32, i32, i32, i32
  }
}

</mosaic_0001>

<llo_original>
// kernel: tpu_custom_call.1
$region0: #{tpu_custom_call.1}
  #allocation0 [shape = 'u32[]', space=smem, size = 0x4, offset = 0x4, fixed_abs, tag = 'smem constant byte address 0x4 - core index']
  #allocation1 [shape = 'u32[144,128]{1,0:T(1,128)}', space=vmem, size = 0x12000, scoped, tag = 'internal scratch']
  %s0 = inlined_call_operand.vmem [shape: bf16[2,36,256], index: 0, kind: input, shape index: {}]
  %s1 = inlined_call_operand.vmem [shape: bf16[8,36], index: 1, kind: input, shape index: {}]
  %s2 = inlined_call_operand.hbm [shape: bf16[2,8,256], index: 2, kind: output, shape index: {0}]
  %s3 = inlined_call_operand.vmem [shape: f32[2,1,8,1], index: 3, kind: output, shape index: {1}]
  %s4 = inlined_call_operand.vmem [shape: f32[2,1,8,1], index: 4, kind: output, shape index: {2}]
  %5 = xla_tuple %s2, %s3, %s4
  %s6 = sld [smem:[#allocation0]]
  $region57: #{tpu_custom_call.1} parent=0
    _
  %s8 = ssub.s32 1, %s6
  %s9 = scalar_select 0, %s8, %s6
  $region1: #{tpu_custom_call.1} parent=0
    #allocation2 [shape = 'u8[8192]{0}', space=vmem, size = 0x2000, scoped, tag = 'output window, operand 0']
    #allocation3 [shape = 's32[2]{0}', space=sflag, size = 0x8, scoped, tag = 'scoped memory for tpu_custom_call.1']
    %10 = vsyncpa [#allocation3], 0
    %s11 = scalar_lea.sflag [#allocation3], 1
    %12 = vsyncpa %s11, 0
    loop: start=0, step=1, limit=4
    $region2: #{tpu_custom_call.1} parent=1 // loop_pre_header
      _
    $region3: #{tpu_custom_call.1} parent=1 // loop_header
      %s14 = sphi 0, %s18
      %p15 = scmp.ge.s32.totalorder %s14, 4
      %s21 = sphi 0, %s33
      %s22 = sphi 0, %s29
      %s23 = sphi 0, %s21
      %s24 = sphi 0, %s22
      %s25 = sphi 0, %s23
      %s26 = sphi 0, %s24
      %s38 = sphi 0, %s40
      %s41 = sphi 0, %s38
      %s42 = sphi 0, %s41
      %s58 = sphi 0, %s42
      %s62 = sphi 0, %s62
      %s64 = sphi 0, %s62
      %s65 = sphi 0, %s64
      %s79 = sphi 0, %s65
      %s87 = sphi 0, %s89
      %s90 = sphi 0, %s87
      %s91 = sphi 0, %s90
      %s107 = sphi 0, %s91
      %s115 = sphi 0, %s117
      %s118 = sphi 0, %s115
      %s119 = sphi 0, %s118
      %s135 = sphi 0, %s119
      %s143 = sphi 0, %s145
      %s146 = sphi 0, %s143
      %s147 = sphi 0, %s146
      %s163 = sphi 0, %s147
    $region4: #{tpu_custom_call.1} parent=1 // loop_header_branch
      %17 = sbr.rel (%p15) target = $region8
    $region5: #{tpu_custom_call.1} parent=1 // loop_body
      %s19 = ssub.s32 %s14, 1
      %s20 = ssub.s32 %s14, 2
      %s27 = sadd.s32 1, %s22
      %p28 = scmp.ge.s32.totalorder %s27, 1
      %s29 = scalar_select %p28, 0, %s27
      %s30 = sadd.s32 1, %s21
      %s31 = scalar_select %p28, %s30, %s21
      %p32 = scmp.ge.s32.totalorder %s31, 2
      %s33 = scalar_select %p32, 0, %s31
      %s34 = ssub.s32 %s21, %s33
      %s35 = ssub.s32 %s22, %s29
      %s36 = sor.u32 %s34, %s35
      %p37 = scmp.eq.s32.totalorder %s36, 0
      %s39 = sadd.s32 %s38, 1
      %s40 = scalar_select %p37, %s38, %s39
      %p43 = pneg %p37
      %p44 = scmp.eq.s32.totalorder %s14, 1
      %p45 = por %p43, %p44
      %p46 = scmp.ne.s32.totalorder %s38, %s41
      %p47 = scmp.eq.s32.totalorder %s14, 0
      %p48 = por %p46, %p47
      %p49 = scmp.ne.s32.totalorder %s38, %s41
      %p50 = scmp.eq.s32.totalorder %s19, 1
      %p51 = por %p49, %p50
      %p52 = scmp.ne.s32.totalorder %s41, %s42
      %p53 = scmp.eq.s32.totalorder %s19, 0
      %p54 = por %p52, %p53
      %p55 = scmp.ne.s32.totalorder %s41, %s42
      %p56 = scmp.eq.s32.totalorder %s20, 1
      %p57 = por %p55, %p56
      %p59 = scmp.ne.s32.totalorder %s42, %s58
      %p60 = scmp.eq.s32.totalorder %s20, 0
      %p61 = por %p59, %p60
      %s63 = sadd.s32 %s62, 1
      %p66 = scmp.eq.s32.totalorder %s14, 1
      %p67 = scmp.ne.s32.totalorder %s62, %s64
      %p68 = scmp.eq.s32.totalorder %s14, 0
      %p69 = por %p67, %p68
      %p70 = scmp.ne.s32.totalorder %s62, %s64
      %p71 = scmp.eq.s32.totalorder %s19, 1
      %p72 = por %p70, %p71
      %p73 = scmp.ne.s32.totalorder %s64, %s65
      %p74 = scmp.eq.s32.totalorder %s19, 0
      %p75 = por %p73, %p74
      %p76 = scmp.ne.s32.totalorder %s64, %s65
      %p77 = scmp.eq.s32.totalorder %s20, 1
      %p78 = por %p76, %p77
      %p80 = scmp.ne.s32.totalorder %s65, %s79
      %p81 = scmp.eq.s32.totalorder %s20, 0
      %p82 = por %p80, %p81
      %s83 = ssub.s32 %s21, %s33
      %s84 = ssub.s32 %s22, %s29
      %s85 = sor.u32 %s83, %s84
      %p86 = scmp.eq.s32.totalorder %s85, 0
      %s88 = sadd.s32 %s87, 1
      %s89 = scalar_select %p86, %s87, %s88
      %p92 = pneg %p86
      %p93 = scmp.eq.s32.totalorder %s14, 1
      %p94 = por %p92, %p93
      %p95 = scmp.ne.s32.totalorder %s87, %s90
      %p96 = scmp.eq.s32.totalorder %s14, 0
      %p97 = por %p95, %p96
      %p98 = scmp.ne.s32.totalorder %s87, %s90
      %p99 = scmp.eq.s32.totalorder %s19, 1
      %p100 = por %p98, %p99
      %p101 = scmp.ne.s32.totalorder %s90, %s91
      %p102 = scmp.eq.s32.totalorder %s19, 0
      %p103 = por %p101, %p102
      %p104 = scmp.ne.s32.totalorder %s90, %s91
      %p105 = scmp.eq.s32.totalorder %s20, 1
      %p106 = por %p104, %p105
      %p108 = scmp.ne.s32.totalorder %s91, %s107
      %p109 = scmp.eq.s32.totalorder %s20, 0
      %p110 = por %p108, %p109
      %s111 = ssub.s32 %s21, %s33
      %s112 = ssub.s32 %s22, %s29
      %s113 = sor.u32 %s111, %s112
      %p114 = scmp.eq.s32.totalorder %s113, 0
      %s116 = sadd.s32 %s115, 1
      %s117 = scalar_select %p114, %s115, %s116
      %p120 = pneg %p114
      %p121 = scmp.eq.s32.totalorder %s14, 1
      %p122 = por %p120, %p121
      %p123 = scmp.ne.s32.totalorder %s115, %s118
      %p124 = scmp.eq.s32.totalorder %s14, 0
      %p125 = por %p123, %p124
      %p126 = scmp.ne.s32.totalorder %s115, %s118
      %p127 = scmp.eq.s32.totalorder %s19, 1
      %p128 = por %p126, %p127
      %p129 = scmp.ne.s32.totalorder %s118, %s119
      %p130 = scmp.eq.s32.totalorder %s19, 0
      %p131 = por %p129, %p130
      %p132 = scmp.ne.s32.totalorder %s118, %s119
      %p133 = scmp.eq.s32.totalorder %s20, 1
      %p134 = por %p132, %p133
      %p136 = scmp.ne.s32.totalorder %s119, %s135
      %p137 = scmp.eq.s32.totalorder %s20, 0
      %p138 = por %p136, %p137
      %s139 = ssub.s32 %s21, %s33
      %s140 = ssub.s32 %s22, %s29
      %s141 = sor.u32 %s139, %s140
      %p142 = scmp.eq.s32.totalorder %s141, 0
      %s144 = sadd.s32 %s143, 1
      %s145 = scalar_select %p142, %s143, %s144
      %p148 = pneg %p142
      %p149 = scmp.eq.s32.totalorder %s14, 1
      %p150 = por %p148, %p149
      %p151 = scmp.ne.s32.totalorder %s143, %s146
      %p152 = scmp.eq.s32.totalorder %s14, 0
      %p153 = por %p151, %p152
      %p154 = scmp.ne.s32.totalorder %s143, %s146
      %p155 = scmp.eq.s32.totalorder %s19, 1
      %p156 = por %p154, %p155
      %p157 = scmp.ne.s32.totalorder %s146, %s147
      %p158 = scmp.eq.s32.totalorder %s19, 0
      %p159 = por %p157, %p158
      %p160 = scmp.ne.s32.totalorder %s146, %s147
      %p161 = scmp.eq.s32.totalorder %s20, 1
      %p162 = por %p160, %p161
      %p164 = scmp.ne.s32.totalorder %s147, %s163
      %p165 = scmp.eq.s32.totalorder %s20, 0
      %p166 = por %p164, %p165
      %p167 = scmp.le.s32.totalorder 1, %s14
      %p168 = scmp.lt.s32.totalorder %s14, 3
      %p169 = pnand %p167, %p168
      %p170 = pneg %p169
      // Predicated region
      $region9: #{tpu_custom_call.1} parent=5 // pred_check
        _
      $region10: #{tpu_custom_call.1} parent=5 // pred_check_branch
        %172 = sbr.rel (%p169) target = $region12
      $region11: #{tpu_custom_call.1} parent=5 // pred_region
        %s173 = ssub.s32 %s14, 1
        // Predicated region
        $region13: #{tpu_custom_call.1} parent=11 // pred_check
          %p174 = pneg %p75
        $region14: #{tpu_custom_call.1} parent=11 // pred_check_branch
          %176 = sbr.rel (%p174) target = $region16
        $region15: #{tpu_custom_call.1} parent=11 // pred_region
          _
        $region16: #{tpu_custom_call.1} parent=11 // pred_fallthru
          _
      $region12: #{tpu_custom_call.1} parent=5 // pred_fallthru
        _
      %p177 = scmp.lt.s32.totalorder %s14, 2
      // Predicated region
      $region17: #{tpu_custom_call.1} parent=5 // pred_check
        %p178 = pneg %p177
      $region18: #{tpu_custom_call.1} parent=5 // pred_check_branch
        %180 = sbr.rel (%p178) target = $region20
      $region19: #{tpu_custom_call.1} parent=5 // pred_region
        // Predicated region
        $region21: #{tpu_custom_call.1} parent=19 // pred_check
          %p181 = pneg %p48
        $region22: #{tpu_custom_call.1} parent=19 // pred_check_branch
          %183 = sbr.rel (%p181) target = $region24
        $region23: #{tpu_custom_call.1} parent=19 // pred_region
          %s184 = smul.u32 2, %s22
          %p185 = scmp.lt.s32.totalorder %s21, 1
          %s186 = scalar_select %p185, %s21, 1
          %p187 = scmp.lt.s32.totalorder %s184, 1
          %s188 = scalar_select %p187, %s184, 1
          %s189 = smul.addr %s186, 10
          %s190 = sadd.s32 %s188, %s189
          %s191 = smul.addr %s190, 4
          %s192 = scalar_lea.vmem %s0, %s191
          %s193 = smul.u32 2, %s22
        $region24: #{tpu_custom_call.1} parent=19 // pred_fallthru
          _
      $region20: #{tpu_custom_call.1} parent=5 // pred_fallthru
        _
      %p194 = scmp.le.s32.totalorder 1, %s14
      %p195 = scmp.lt.s32.totalorder %s14, 3
      %p196 = pnand %p194, %p195
      %p197 = pneg %p196
      // Predicated region
      $region25: #{tpu_custom_call.1} parent=5 // pred_check
        _
      $region26: #{tpu_custom_call.1} parent=5 // pred_check_branch
        %199 = sbr.rel (%p196) target = $region28
      $region27: #{tpu_custom_call.1} parent=5 // pred_region
        %s200 = ssub.s32 %s14, 1
        %s201 = smul.u32 2, %s24
        %p202 = scmp.lt.s32.totalorder %s23, 1
        %s203 = scalar_select %p202, %s23, 1
        %p204 = scmp.lt.s32.totalorder %s201, 1
        %s205 = scalar_select %p204, %s201, 1
        %s206 = smul.addr %s203, 10
        %s207 = sadd.s32 %s205, %s206
        %s208 = smul.addr %s207, 4
        %s209 = scalar_lea.vmem %s0, %s208
        %p210 = pneg %p54
        %p211 = pneg %p51
        %p212 = pneg %p75
        %p213 = pneg %p72
        %p214 = pneg %p103
        %p215 = pneg %p100
        %s216 = sand.u32 %s90, 1
        %s217 = scalar_lea.sflag [#allocation3], %s216
        %s218 = sand.u32 %s90, 1
        %s219 = smul.addr %s218, 8
        %s220 = scalar_lea.vmem [#allocation2], %s219
        %p221 = pneg %p131
        %p222 = pneg %p128
        %p223 = scmp.lt.s32.totalorder %s23, 1
        %s224 = scalar_select %p223, %s23, 1
        %p225 = scmp.lt.s32.totalorder %s24, 0
        %s226 = scalar_select %p225, %s24, 0
        %s227 = sadd.s32 %s226, %s224
        %s228 = smul.addr %s227, 8
        %s229 = scalar_lea.vmem %s3, %s228
        %p230 = pneg %p159
        %p231 = pneg %p156
        %p232 = scmp.lt.s32.totalorder %s23, 1
        %s233 = scalar_select %p232, %s23, 1
        %p234 = scmp.lt.s32.totalorder %s24, 0
        %s235 = scalar_select %p234, %s24, 0
        %s236 = sadd.s32 %s235, %s233
        %s237 = smul.addr %s236, 8
        %s238 = scalar_lea.vmem %s4, %s237
        %s239 = smul.u32 2, %s24
        %p240 = scmp.lt.s32.totalorder %s23, 1
        %s241 = scalar_select %p240, %s23, 1
        %p242 = scmp.lt.s32.totalorder %s239, 1
        %s243 = scalar_select %p242, %s239, 1
        %s244 = smul.addr %s241, 10
        %s245 = sadd.s32 %s243, %s244
        %s246 = smul.addr %s245, 4
        %s247 = scalar_lea.vmem %s0, %s246
        %s248 = smul.u32 2, %s24
        %s249 = smul.u32 2, %s24
        %p250 = scmp.lt.s32.totalorder %s23, 1
        %s251 = scalar_select %p250, %s23, 1
        %p252 = scmp.lt.s32.totalorder %s24, 0
        %s253 = scalar_select %p252, %s24, 0
        %s254 = sadd.s32 %s253, %s251
        %s255 = smul.addr %s254, 8
        %s256 = scalar_lea.vmem %s3, %s255
        %p257 = scmp.lt.s32.totalorder %s23, 1
        %s258 = scalar_select %p257, %s23, 1
        %p259 = scmp.lt.s32.totalorder %s24, 0
        %s260 = scalar_select %p259, %s24, 0
        %s261 = sadd.s32 %s260, %s258
        %s262 = smul.addr %s261, 8
        %s263 = scalar_lea.vmem %s4, %s262
        %v265 = vld [vmem:[%s1] sm:$0xf]
        %v266 = vld [vmem:[%s247] sm:$0xff]
        %v267 = vld [vmem:[%s247 + $0x8] sm:$0xff]
        %v268 = vld [vmem:[%s247 + $0x10] sm:$0xff]
        %v269 = vld [vmem:[%s247 + $0x18] sm:$0xff]
        %v270 = vld [vmem:[%s247 + $0x20] sm:$0x33]
        %v276 = vunpack.c.l.b16 %v266
        %v277 = vunpack.c.h.b16 %v266
        %v278 = vunpack.c.l.b16 %v267
        %v279 = vunpack.c.h.b16 %v267
        %v280 = vunpack.c.l.b16 %v268
        %v281 = vunpack.c.h.b16 %v268
        %v282 = vunpack.c.l.b16 %v269
        %v283 = vunpack.c.h.b16 %v269
        %v284 = vunpack.c.l.b16 %v270
        %v285 = vunpack.c.h.b16 %v270
        %v286 = vpack.c.b16 %v278, %v276
        %v287 = vpack.c.b16 %v279, %v277
        %v288 = vpack.c.b16 %v282, %v280
        %v289 = vpack.c.b16 %v283, %v281
        %v290 = vpack.c.b16 %v284, %v284
        %v291 = vpack.c.b16 %v285, %v285
        %vm296 = vcmask 293888
        %v298 = vsel %vm296, %v265, 0
        %vm300 = vcmask 1041408
        %v302 = vsel %vm300, %v290, 0
        %v305 = vsel %vm300, %v291, 0
        %307 = vmatprep.subr.bf16.mxu0 0
        %308 = vmatpush1.bf16.msra.mxu0 0
        %309 = vmatprep.subr.bf16.mxu0 0
        %310 = vmatpush1.bf16.msra.mxu0 0
        %311 = vmatprep.subr.bf16.mxu0 0
        %312 = vmatpush1.bf16.msra.mxu0 0
        %313 = vmatprep.subr.bf16.mxu0 0
        %314 = vmatpush1.bf16.msra.mxu0 0
        %315 = vmatprep.subr.bf16.mxu0 0
        %316 = vmatpush1.bf16.msra.mxu0 0
        %317 = vmatprep.subr.bf16.mxu0 %v305
        %318 = vmatpush1.bf16.msra.mxu0 %v302
        %319 = vmatprep.subr.bf16.mxu0 %v289
        %320 = vmatpush1.bf16.msra.mxu0 %v288
        %321 = vmatprep.subr.bf16.mxu0 %v287
        %322 = vmatpush1.bf16.msra.mxu0 %v286
        %323 = vmatprep.subr.bf16.mxu0 0
        %324 = vmatpush2.bf16.msra.mxu0 0
        %325 = vmatprep.subr.bf16.mxu0 0
        %326 = vmatpush2.bf16.msra.mxu0 0
        %327 = vmatprep.subr.bf16.mxu0 0
        %328 = vmatpush2.bf16.msra.mxu0 0
        %329 = vmatprep.subr.bf16.mxu0 0
        %330 = vmatpush2.bf16.msra.mxu0 0
        %331 = vmatprep.subr.bf16.mxu0 0
        %332 = vmatpush2.bf16.msra.mxu0 0
        %333 = vmatprep.subr.bf16.mxu0 0
        %334 = vmatpush2.bf16.msra.mxu0 0
        %335 = vmatprep.subr.bf16.mxu0 0
        %336 = vmatpush2.bf16.msra.mxu0 0
        %337 = vmatprep.subr.bf16.mxu0 0
        %338 = vmatpush2.bf16.msra.mxu0 0
        %339 = vmatprep.mubr.bf16.mxu0 0
        %340 = vmatmul.mubr.bf16.gmra.mxu0 %v298
        %v341 = vpop.f32.mrf.mxu0
        %v342 = vadd.f32 0.0, %v341
        %v343 = vpop.f32.mrf.mxu0
        %v344 = vadd.f32 0.0, %v343
        %v345 = vpop.f32.mrf.mxu0
        %v346 = vpop.f32.mrf.mxu0
        %347 = vdwg.mxu0
        %v348 = vpack.c.bf16 %v342, %v342
        %v349 = vpack.c.bf16 %v344, %v344
        %v352 = vunpack.c.l.b16 %v348
        %v353 = vunpack.c.l.b16 %v349
        %v354 = vpack.c.b16 %v353, %v352
        %356 = vst [vmem:[%s220] sm:$0xff] %v354
        %v357 = vadd.f32 %v342, %v344
        %358 = vadd.xlane.f32.xlu0 %v357
        %v359 = vpop.xlane.xlu0 %358
        %vm360 = vcmask 7168
        %361 = vst.msk [vmem:[%s256] sm:$0xff] %vm360, %v359
        %v362 = vmul.f32 %v342, %v342
        %v363 = vmul.f32 %v344, %v344
        %v364 = vadd.f32 %v362, %v363
        %365 = vadd.xlane.f32.xlu0 %v364
        %v366 = vpop.xlane.xlu0 %365
        %367 = vst.msk [vmem:[%s263] sm:$0xff] %vm360, %v366
        %s368 = sand.u32 %s90, 1
        %s369 = scalar_lea.sflag [#allocation3], %s368
        %s370 = sand.u32 %s90, 1
        %s371 = smul.addr %s370, 8
        %s372 = scalar_lea.vmem [#allocation2], %s371
        %p373 = scmp.lt.s32.totalorder %s23, 1
        %s374 = scalar_select %p373, %s23, 1
        %p375 = scmp.lt.s32.totalorder %s24, 0
        %s376 = scalar_select %p375, %s24, 0
        %s377 = sadd.s32 %s376, %s374
        %s378 = smul.addr %s377, 8
        %s379 = scalar_lea.vmem %s3, %s378
        %p380 = scmp.lt.s32.totalorder %s23, 1
        %s381 = scalar_select %p380, %s23, 1
        %p382 = scmp.lt.s32.totalorder %s24, 0
        %s383 = scalar_select %p382, %s24, 0
        %s384 = sadd.s32 %s383, %s381
        %s385 = smul.addr %s384, 8
        %s386 = scalar_lea.vmem %s4, %s385
        // Predicated region
        $region29: #{tpu_custom_call.1} parent=27 // pred_check
          %p387 = pneg %p100
        $region30: #{tpu_custom_call.1} parent=27 // pred_check_branch
          %389 = sbr.rel (%p387) target = $region32
        $region31: #{tpu_custom_call.1} parent=27 // pred_region
          %s390 = smul.u32 2, %s24
          %s392 = ssub.s32 128, 128
          %393 = vsyncadd %s369, %s392
          %s394 = smul.addr %s23, 2
          %s395 = sadd.s32 %s390, %s394
          %s396 = smul.addr %s395, 64
          %s397 = scalar_lea.hbm %s2, %s396
          %s399 = sshll.u32 %s372, 4
          %s400 = int_to_ptr.vmem [resolvable:$true] %s399
          %402 = dma.vmem_to_hbm [thread:$0]  %s400, 128, %s397, %s369
        $region32: #{tpu_custom_call.1} parent=27 // pred_fallthru
          _
        // Predicated region
        $region33: #{tpu_custom_call.1} parent=27 // pred_check
          %p403 = pneg %p128
        $region34: #{tpu_custom_call.1} parent=27 // pred_check_branch
          %405 = sbr.rel (%p403) target = $region36
        $region35: #{tpu_custom_call.1} parent=27 // pred_region
          _
        $region36: #{tpu_custom_call.1} parent=27 // pred_fallthru
          _
        // Predicated region
        $region37: #{tpu_custom_call.1} parent=27 // pred_check
          %p406 = pneg %p156
        $region38: #{tpu_custom_call.1} parent=27 // pred_check_branch
          %408 = sbr.rel (%p406) target = $region40
        $region39: #{tpu_custom_call.1} parent=27 // pred_region
          _
        $region40: #{tpu_custom_call.1} parent=27 // pred_fallthru
          _
      $region28: #{tpu_custom_call.1} parent=5 // pred_fallthru
        _
      %p409 = scmp.le.s32.totalorder 2, %s14
      // Predicated region
      $region41: #{tpu_custom_call.1} parent=5 // pred_check
        %p410 = pneg %p409
      $region42: #{tpu_custom_call.1} parent=5 // pred_check_branch
        %412 = sbr.rel (%p410) target = $region44
      $region43: #{tpu_custom_call.1} parent=5 // pred_region
        %s413 = ssub.s32 %s14, 2
        // Predicated region
        $region45: #{tpu_custom_call.1} parent=43 // pred_check
          %p414 = pneg %p106
        $region46: #{tpu_custom_call.1} parent=43 // pred_check_branch
          %416 = sbr.rel (%p414) target = $region48
        $region47: #{tpu_custom_call.1} parent=43 // pred_region
          %s417 = sand.u32 %s91, 1
          %s418 = scalar_lea.sflag [#allocation3], %s417
          %s419 = sand.u32 %s91, 1
          %s420 = smul.addr %s419, 8
          %s421 = scalar_lea.vmem [#allocation2], %s420
          %422 = dma.done %s418, 128
        $region48: #{tpu_custom_call.1} parent=43 // pred_fallthru
          _
        // Predicated region
        $region49: #{tpu_custom_call.1} parent=43 // pred_check
          %p423 = pneg %p134
        $region50: #{tpu_custom_call.1} parent=43 // pred_check_branch
          %425 = sbr.rel (%p423) target = $region52
        $region51: #{tpu_custom_call.1} parent=43 // pred_region
          %p426 = scmp.lt.s32.totalorder %s25, 1
          %s427 = scalar_select %p426, %s25, 1
          %p428 = scmp.lt.s32.totalorder %s26, 0
          %s429 = scalar_select %p428, %s26, 0
          %s430 = sadd.s32 %s429, %s427
          %s431 = smul.addr %s430, 8
          %s432 = scalar_lea.vmem %s3, %s431
        $region52: #{tpu_custom_call.1} parent=43 // pred_fallthru
          _
        // Predicated region
        $region53: #{tpu_custom_call.1} parent=43 // pred_check
          %p433 = pneg %p162
        $region54: #{tpu_custom_call.1} parent=43 // pred_check_branch
          %435 = sbr.rel (%p433) target = $region56
        $region55: #{tpu_custom_call.1} parent=43 // pred_region
          %p436 = scmp.lt.s32.totalorder %s25, 1
          %s437 = scalar_select %p436, %s25, 1
          %p438 = scmp.lt.s32.totalorder %s26, 0
          %s439 = scalar_select %p438, %s26, 0
          %s440 = sadd.s32 %s439, %s437
          %s441 = smul.addr %s440, 8
          %s442 = scalar_lea.vmem %s4, %s441
        $region56: #{tpu_custom_call.1} parent=43 // pred_fallthru
          _
      $region44: #{tpu_custom_call.1} parent=5 // pred_fallthru
        _
    $region6: #{tpu_custom_call.1} parent=1 // loop_footer
      %s18 = sadd.s32 1, %s14
    $region7: #{tpu_custom_call.1} parent=1 // loop_footer_branch
      %13 = sbr.rel target = $region3
    $region8: #{tpu_custom_call.1} parent=1 // loop_exit
      _
    %443 = vsyncpa [#allocation3], 1
    %s444 = scalar_lea.sflag [#allocation3], 1
    %445 = vsyncpa %s444, 1

</llo_original>
